<compile_context>
chip_gen: v5e
topology: v5e:2x2
jax: 0.10.0
libtpu: 0.0.40
codegen_flags: <defaults>
</compile_context>

<pallas_src>
import functools

import jax
import jax.numpy as jnp
from jax.experimental import pallas as pl
from jax.experimental.pallas import tpu as pltpu

# ----------------------------- configuration --------------------------------
PAD_TOKEN_ID = 0
EPS = 0.1          # stand-in for model.hparams.eps
HIDDEN = 64
VOCAB = 200        # deliberately NOT a multiple of 128 -> exercises vocab padding


def _round_up(x, m):
    return (x + m - 1) // m * m


def _vmem_capacity_bytes():
    try:
        return int(pltpu.get_tpu_info().vmem_capacity_bytes)
    except Exception:  # pragma: no cover - conservative (v7x-sized) fallback
        return 64 * 1024 * 1024


def _choose_tiles(n, hdim, v_pad, tm, tv, force_stream_w):
    """Pick (tm, tv, w_resident) against the generation's real VMEM budget."""
    vmem_cap = _vmem_capacity_bytes()
    budget = (vmem_cap * 3) // 5          # headroom for Mosaic scratch / dbl buffers
    w_bytes = hdim * v_pad * 2            # bf16 LM-head weight

    # Small-hidden fast path: W fully VMEM-resident (counted x2 for the pipeline
    # buffers), fetched from HBM exactly once instead of once per row tile.
    w_resident = (not force_stream_w) and (2 * w_bytes <= min(budget // 2, 32 << 20))

    if tm is None:
        tm = 512                          # bigger row tile => fewer W re-streams
    tm = max(16, _round_up(min(tm, _round_up(n, 16)), 16))   # bf16 sublane friendly

    if tv is None:
        k = v_pad // 128
        tv = 128
        for d in range(k, 0, -1):         # largest vocab tile that fits the budget
            if k % d:
                continue
            cand = 128 * d
            if cand > 2048:               # keep v7x-friendly even at huge vocabs
                continue
            w_use = 2 * w_bytes if w_resident else 2 * hdim * cand * 2
            use = (w_use
                   + 2 * tm * hdim * 2                      # dbl-buffered h (bf16)
                   + 2 * tm * cand * 2                      # dbl-buffered bf16 logits
                   + 2 * (v_pad if w_resident else cand) * 4   # bias
                   + 2 * tm * 4                             # targets
                   + 4 * tm * 4                             # f32 scratch accumulators
                   + 2 * 16 * 128 * 4)                      # partial-loss output
            if use <= budget:
                tv = cand
                break
    assert tv % 128 == 0 and v_pad % tv == 0
    return tm, tv, w_resident


# ----------------------------- fused Pallas kernel ---------------------------
def _fused_lmhead_loss_kernel(h_ref, w_ref, b_ref, tgt_ref,
                              logits_ref, part_ref,
                              m_sc, l_sc, rowsum_sc, tgtlogit_sc,
                              *, tv, true_vocab, v_padded, pad_token_id,
                              w_resident):
    """grid = (row_tiles [parallel], vocab_tiles [arbitrary, last]).

    Per step: logits tile = h_tile(bf16) @ w_tile(bf16) + bias (f32 acc),
    emit the bf16 logits tile, and fold it into an online-softmax /
    label-smoothing accumulation kept in VMEM scratch.  Finalize on the last
    vocab tile.
    """
    kv = pl.program_id(1)
    nvt = pl.num_programs(1)

    if w_resident:
        # W resident as (nvt, hdim, tv); dynamic index on the leading dim only.
        w_tile = w_ref[kv]                                 # (hdim, tv)
        b_tile = b_ref[kv]                                 # (1, tv)
    else:
        w_tile = w_ref[...]
        b_tile = b_ref[...]

    # MXU matmul with f32 accumulation; bias added once per (row, vocab) tile.
    # NOTE: with hdim=64 only a fraction of the MXU rows are used, so the
    # kernel is memory/VPU bound -- hence the memory-side optimizations.
    logits = jnp.dot(h_ref[...], w_tile,
                     preferred_element_type=jnp.float32) + b_tile
    logits_ref[...] = logits.astype(logits_ref.dtype)      # bf16 writeback

    tgt = tgt_ref[...]                                      # (tm, 1) int32
    lane = jax.lax.broadcasted_iota(jnp.int32, (1, tv), 1)  # loop-invariant iota
    tgt_local = tgt - kv * tv                               # (tm, 1)
    is_tgt = lane == tgt_local                              # (tm, tv) via broadcast

    @pl.when(kv == 0)
    def _():
        m_sc[...] = jnp.full_like(m_sc, -jnp.inf)
        l_sc[...] = jnp.zeros_like(l_sc)
        rowsum_sc[...] = jnp.zeros_like(rowsum_sc)
        tgtlogit_sc[...] = jnp.zeros_like(tgtlogit_sc)

    # online softmax statistics (exact in f32)
    m_prev = m_sc[...]
    m_new = jnp.maximum(m_prev, jnp.max(logits, axis=-1, keepdims=True))
    alpha = jnp.exp(m_prev - m_new)
    l_sc[...] = alpha * l_sc[...] + jnp.sum(jnp.exp(logits - m_new),
                                            axis=-1, keepdims=True)
    m_sc[...] = m_new

    if v_padded != true_vocab:
        # Padded vocab columns carry a -1e30 bias so exp() underflows to zero in
        # the lse; exclude them from the plain row-sum explicitly.
        valid = lane < (true_vocab - kv * tv)               # (1, tv)
        rowsum_term = jnp.where(valid, logits, 0.0)
    else:
        rowsum_term = logits
    # (an MXU offload of this rowsum is possible if XLU turns out to be the
    #  binding slot on v6e/v7x; not done here — profile first)
    rowsum_sc[...] = rowsum_sc[...] + jnp.sum(rowsum_term, axis=-1, keepdims=True)
    tgtlogit_sc[...] = tgtlogit_sc[...] + jnp.sum(
        jnp.where(is_tgt, logits, 0.0), axis=-1, keepdims=True)

    @pl.when(kv == nvt - 1)
    def _():
        lse = m_sc[...] + jnp.log(l_sc[...])                # (tm, 1)
        nll = lse - tgtlogit_sc[...]                        # -lprobs[target]
        smooth = true_vocab * lse - rowsum_sc[...]          # -sum(lprobs)
        keep = (tgt != pad_token_id).astype(jnp.float32)    # ignore_index mask
        nll_sum = jnp.sum(nll * keep)
        smooth_sum = jnp.sum(smooth * keep)
        # one lane-dense (1, 16, 128) store: sublanes 0-7 = nll, 8-15 = smooth
        sub = jax.lax.broadcasted_iota(jnp.int32, part_ref.shape, 1)
        part_ref[...] = jnp.where(sub < 8, nll_sum, smooth_sum)


# ----------------------------- wrapper ---------------------------------------
def fused_lm_head_loss(h_flat, w_lm, b_lm, target_flat, pad_token_id,
                       *, tm=None, tv=None, force_stream_w=False):
    """Returns (logits[n, v] bf16, nll_sum, smooth_sum) from one pallas_call."""
    n, hdim = h_flat.shape
    v = w_lm.shape[1]
    v_pad = _round_up(v, 128)

    tm, tv, w_resident = _choose_tiles(n, hdim, v_pad, tm, tv, force_stream_w)

    n_pad = _round_up(n, tm)
    rt = n_pad // tm
    nvt = v_pad // tv

    # pad rows (padded targets -> pad_token_id so they are masked out) and vocab
    # columns (zero weights, -1e30 bias so they vanish from the softmax).
    h_p = jnp.zeros((n_pad, hdim), jnp.bfloat16).at[:n].set(
        h_flat.astype(jnp.bfloat16))
    tgt_p = jnp.full((n_pad, 1), pad_token_id, jnp.int32).at[:n, 0].set(
        target_flat.astype(jnp.int32))
    w_p = jnp.zeros((hdim, v_pad), jnp.bfloat16).at[:, :v].set(
        w_lm.astype(jnp.bfloat16))
    b_p = jnp.full((1, v_pad), -1e30, jnp.float32).at[:, :v].set(
        b_lm.astype(jnp.float32).reshape(1, v))

    if w_resident:
        # (nvt, hdim, tv) resident block, constant index_map -> one HBM fetch.
        w_in = w_p.reshape(hdim, nvt, tv).transpose(1, 0, 2)
        b_in = b_p.reshape(nvt, 1, tv)
        w_spec = pl.BlockSpec((nvt, hdim, tv), lambda i, j: (0, 0, 0))
        b_spec = pl.BlockSpec((nvt, 1, tv), lambda i, j: (0, 0, 0))
        w_stream_bytes = hdim * v_pad * 2
        bias_stream_bytes = v_pad * 4
    else:
        w_in = w_p
        b_in = b_p
        w_spec = pl.BlockSpec((hdim, tv), lambda i, j: (0, j))
        b_spec = pl.BlockSpec((1, tv), lambda i, j: (0, j))
        w_stream_bytes = rt * hdim * v_pad * 2       # W re-streamed per row tile
        bias_stream_bytes = rt * v_pad * 4
        # (on v5e only: pl.Buffered(3) on w_spec can help if the trace shows
        #  exposed W DMA; not applied by default to protect v7x's VMEM budget)

    kernel = functools.partial(
        _fused_lmhead_loss_kernel, tv=tv, true_vocab=v, v_padded=v_pad,
        pad_token_id=pad_token_id, w_resident=w_resident)

    cost = pl.CostEstimate(
        flops=2 * n_pad * hdim * v_pad,
        transcendentals=n_pad * v_pad + 2 * n_pad,
        bytes_accessed=int(n_pad * hdim * 2 + w_stream_bytes + bias_stream_bytes
                           + n_pad * 4 + n_pad * v_pad * 2      # bf16 logits
                           + rt * 16 * 128 * 4),
    )

    logits, parts = pl.pallas_call(
        kernel,
        out_shape=(
            jax.ShapeDtypeStruct((n_pad, v_pad), jnp.bfloat16),  # halved writeback
            jax.ShapeDtypeStruct((rt, 16, 128), jnp.float32),    # merged partials
        ),
        grid_spec=pltpu.PrefetchScalarGridSpec(
            num_scalar_prefetch=0,
            grid=(rt, nvt),                                      # vocab axis last
            in_specs=[
                pl.BlockSpec((tm, hdim), lambda i, j: (i, 0)),   # activations
                w_spec,                                          # LM-head W
                b_spec,                                          # bias
                pl.BlockSpec((tm, 1), lambda i, j: (i, 0)),      # targets
            ],
            out_specs=(
                pl.BlockSpec((tm, tv), lambda i, j: (i, j)),     # logits
                pl.BlockSpec((1, 16, 128), lambda i, j: (i, 0, 0)),
            ),
            scratch_shapes=[
                pltpu.VMEM((tm, 1), jnp.float32),   # running max
                pltpu.VMEM((tm, 1), jnp.float32),   # running exp-sum
                pltpu.VMEM((tm, 1), jnp.float32),   # running row sum
                pltpu.VMEM((tm, 1), jnp.float32),   # gathered target logit
            ],
        ),
        compiler_params=pltpu.CompilerParams(
            dimension_semantics=("parallel", "arbitrary"),
            vmem_limit_bytes=(_vmem_capacity_bytes() * 3) // 4,
        ),
        cost_estimate=cost,
    )(h_p, w_in, b_in, tgt_p)

    nll_sum = jnp.sum(parts[:, 0, 0])
    smooth_sum = jnp.sum(parts[:, 8, 0])
    return logits[:n, :v], nll_sum, smooth_sum


# ----------------------------- Editor.forward --------------------------------
def make_params(key, vocab=VOCAB, hidden=HIDDEN):
    k1, k2, k3, k4 = jax.random.split(key, 4)
    scale = 0.02
    return {
        "embed_dec": scale * jax.random.normal(k1, (vocab, hidden), jnp.float32),
        "embed_enc": scale * jax.random.normal(k2, (vocab, hidden), jnp.float32),
        "w_lm": scale * jax.random.normal(k3, (hidden, vocab), jnp.float32),
        "b_lm": scale * jax.random.normal(k4, (1, vocab), jnp.float32),
    }


def editor_forward(params, input_ids, attention_mask,
                   decoder_input_ids, decoder_attention_mask,
                   *, eps=EPS, pad_token_id=PAD_TOKEN_ID,
                   tm=None, tv=None, force_stream_w=False):
    """Reproduces Editor.forward: returns {'logtis': logits, 'loss': loss}."""
    dec_in = decoder_input_ids[:, :-1]                    # (B, T)
    target = decoder_input_ids[:, 1:]                     # (B, T)
    b, t = dec_in.shape
    hidden = params["embed_dec"].shape[1]
    vocab = params["w_lm"].shape[1]

    # --- tiny synthetic seq2seq model (stand-in for self.model) ---
    enc_emb = params["embed_enc"][input_ids]                           # (B,S,H)
    amask = attention_mask.astype(jnp.float32)[..., None]              # (B,S,1)
    enc_ctx = jnp.sum(enc_emb * amask, axis=1) / jnp.maximum(
        jnp.sum(amask, axis=1), 1.0)                                   # (B,H)
    h = jnp.tanh(params["embed_dec"][dec_in] + enc_ctx[:, None, :])    # (B,T,H)
    h_flat = h.reshape(b * t, hidden)

    # --- fused LM head + label-smoothed NLL (single Pallas kernel) ---
    logits_flat, nll_sum, smooth_sum = fused_lm_head_loss(
        h_flat, params["w_lm"], params["b_lm"], target.reshape(-1),
        pad_token_id, tm=tm, tv=tv, force_stream_w=force_stream_w)
    logits = logits_flat.reshape(b, t, vocab)

    eps_i = eps / vocab            # true vocab size (padded columns are masked)
    loss = (1.0 - eps) * nll_sum + eps_i * smooth_sum
    ntokens = jnp.sum(decoder_attention_mask[:, 1:]).astype(jnp.float32)
    loss = loss / ntokens

    res = {}
    res["logtis"] = logits         # same (misspelled) key as the PyTorch module
    res["loss"] = loss
    # activate_loss / memory_loss default to 'non_use' -> no extra keys.
    # TODO(synk): act_loss / memo_loss require the editor-injected
    # ModifyLinearOutput submodules (stateful module swapping); not applicable
    # to a pure-functional kernel.
    return res


# ----------------------------------- main -------------------------------------
if __name__ == "__main__":
    key = jax.random.PRNGKey(0)
    kp, k1, k2 = jax.random.split(key, 3)

    params = make_params(kp)

    B, SRC_LEN, TRG_LEN = 2, 10, 17        # decoder sees 16 tokens -> N = 32
    input_ids = jax.random.randint(k1, (B, SRC_LEN), 1, VOCAB, dtype=jnp.int32)
    attention_mask = jnp.concatenate(
        [jnp.ones((B, SRC_LEN - 2), jnp.int32), jnp.zeros((B, 2), jnp.int32)],
        axis=1)
    decoder_input_ids = jax.random.randint(
        k2, (B, TRG_LEN), 1, VOCAB, dtype=jnp.int32)
    # inject padding in targets to exercise ignore_index masking
    decoder_input_ids = decoder_input_ids.at[:, -2:].set(PAD_TOKEN_ID)
    decoder_attention_mask = jnp.concatenate(
        [jnp.ones((B, TRG_LEN - 2), jnp.int32), jnp.zeros((B, 2), jnp.int32)],
        axis=1)

    # run A: small tiles, VMEM-resident W -> exercises the 2x2 (rows x vocab)
    # grid, the online-softmax accumulation and the resident dynamic-index path.
    fwd_resident = jax.jit(lambda p, a, b_, c, d: editor_forward(
        p, a, b_, c, d, tm=16, tv=128))
    res_a = fwd_resident(params, input_ids, attention_mask,
                         decoder_input_ids, decoder_attention_mask)
    jax.block_until_ready(res_a["loss"])
    jax.block_until_ready(res_a["logtis"])

    # run B: auto tile selection + forced streamed-W BlockSpec path.
    fwd_stream = jax.jit(lambda p, a, b_, c, d: editor_forward(
        p, a, b_, c, d, force_stream_w=True))
    res_b = fwd_stream(params, input_ids, attention_mask,
                       decoder_input_ids, decoder_attention_mask)
    jax.block_until_ready(res_b["loss"])

    # sanity check: recompute the loss in plain JAX from the emitted logits
    target = decoder_input_ids[:, 1:].reshape(-1)
    logits_flat = res_a["logtis"].reshape(-1, VOCAB).astype(jnp.float32)
    lprobs = jax.nn.log_softmax(logits_flat, axis=-1)
    keep = (target != PAD_TOKEN_ID).astype(jnp.float32)
    nll_ref = jnp.sum(-jnp.take_along_axis(
        lprobs, target[:, None], axis=-1)[:, 0] * keep)
    smooth_ref = jnp.sum(-jnp.sum(lprobs, axis=-1) * keep)
    ntokens = jnp.sum(decoder_attention_mask[:, 1:]).astype(jnp.float32)
    loss_ref = ((1.0 - EPS) * nll_ref + (EPS / VOCAB) * smooth_ref) / ntokens

    assert res_a["logtis"].shape == (B, TRG_LEN - 1, VOCAB)
    assert jnp.isfinite(res_a["loss"]) and jnp.isfinite(res_b["loss"])
    assert jnp.allclose(res_a["loss"], loss_ref, rtol=2e-3, atol=2e-3), (
        res_a["loss"], loss_ref)
    assert jnp.allclose(res_b["loss"], loss_ref, rtol=2e-3, atol=2e-3), (
        res_b["loss"], loss_ref)
    assert jnp.allclose(res_a["logtis"].astype(jnp.float32),
                        res_b["logtis"].astype(jnp.float32), atol=1e-2)

    print("KERNEL_OK")
</pallas_src>

<mosaic_0001>
module attributes {stable_mosaic.version = 11 : i64} {
  func.func @_fused_lmhead_loss_kernel(%arg0: i32, %arg1: i32, %arg2: memref<16x64xbf16, #tpu.memory_space<vmem>>, %arg3: memref<2x64x128xbf16, #tpu.memory_space<vmem>>, %arg4: memref<2x1x128xf32, #tpu.memory_space<vmem>>, %arg5: memref<16x1xi32, #tpu.memory_space<vmem>>, %arg6: memref<16x128xbf16, #tpu.memory_space<vmem>>, %arg7: memref<1x16x128xf32, #tpu.memory_space<vmem>>, %arg8: memref<16x1xf32, #tpu.memory_space<vmem>>, %arg9: memref<16x1xf32, #tpu.memory_space<vmem>>, %arg10: memref<16x1xf32, #tpu.memory_space<vmem>>, %arg11: memref<16x1xf32, #tpu.memory_space<vmem>>) attributes {dimension_semantics = [#tpu.dimension_semantics<parallel>, #tpu.dimension_semantics<arbitrary>], iteration_bounds = array<i64: 2, 2>, scalar_prefetch = 0 : i64, scratch_operands = 4 : i64, tpu.core_type = #tpu.core_type<tc>, window_params = [{transform_indices = @transform_0, window_bounds = array<i64: 16, 64>}, {pipeline_mode = #tpu.pipeline_mode<synchronous>, transform_indices = @transform_1, window_bounds = array<i64: 2, 64, 128>}, {pipeline_mode = #tpu.pipeline_mode<synchronous>, transform_indices = @transform_2, window_bounds = array<i64: 2, 1, 128>}, {transform_indices = @transform_3, window_bounds = array<i64: 16, 1>}, {transform_indices = @transform_4, window_bounds = array<i64: 16, 128>}, {transform_indices = @transform_5, window_bounds = array<i64: 1, 16, 128>}]} {
    %0 = arith.index_cast %arg1 : i32 to index
    %c0 = arith.constant 0 : index
    %c0_0 = arith.constant 0 : index
    %1 = vector.load %arg3[%0, %c0, %c0_0] : memref<2x64x128xbf16, #tpu.memory_space<vmem>>, vector<1x64x128xbf16>
    %2 = vector.shape_cast %1 : vector<1x64x128xbf16> to vector<64x128xbf16>
    %3 = arith.index_cast %arg1 : i32 to index
    %c0_1 = arith.constant 0 : index
    %c0_2 = arith.constant 0 : index
    %4 = vector.load %arg4[%3, %c0_1, %c0_2] : memref<2x1x128xf32, #tpu.memory_space<vmem>>, vector<1x1x128xf32>
    %5 = vector.shape_cast %4 : vector<1x1x128xf32> to vector<1x128xf32>
    %c0_3 = arith.constant 0 : index
    %c0_4 = arith.constant 0 : index
    %6 = vector.load %arg2[%c0_3, %c0_4] : memref<16x64xbf16, #tpu.memory_space<vmem>>, vector<16x64xbf16>
    %cst = arith.constant dense<0.000000e+00> : vector<16x128xf32>
    %7 = tpu.matmul %6, %2, %cst {dimension_numbers = #tpu.dot_dimension_numbers<[1], [0], [0], [1], [0, 0, 1, 1], [], []>} : vector<16x64xbf16>, vector<64x128xbf16>, vector<16x128xf32> -> vector<16x128xf32>
    %8 = vector.broadcast %5 : vector<1x128xf32> to vector<16x128xf32>
    %9 = arith.addf %7, %8 : vector<16x128xf32>
    %10 = arith.truncf %9 : vector<16x128xf32> to vector<16x128xbf16>
    %c0_5 = arith.constant 0 : index
    %c0_6 = arith.constant 0 : index
    %11 = vector.load %arg6[%c0_5, %c0_6] : memref<16x128xbf16, #tpu.memory_space<vmem>>, vector<16x128xbf16>
    tpu.vector_store %arg6[%c0_5, %c0_6], %10 {strides = array<i32>} : memref<16x128xbf16, #tpu.memory_space<vmem>>, vector<16x128xbf16>,
    %c0_7 = arith.constant 0 : index
    %c0_8 = arith.constant 0 : index
    %12 = vector.load %arg5[%c0_7, %c0_8] : memref<16x1xi32, #tpu.memory_space<vmem>>, vector<16x1xi32>
    %13 = tpu.iota {dimensions = array<i32: 1>} : vector<1x128xi32>
    %c128_i32 = arith.constant 128 : i32
    %14 = arith.muli %arg1, %c128_i32 : i32
    %15 = vector.broadcast %14 : i32 to vector<16x1xi32>
    %16 = arith.subi %12, %15 : vector<16x1xi32>
    %17 = vector.broadcast %13 : vector<1x128xi32> to vector<16x128xi32>
    %18 = vector.broadcast %16 : vector<16x1xi32> to vector<16x128xi32>
    %19 = arith.cmpi eq, %17, %18 : vector<16x128xi32>
    %c0_i32 = arith.constant 0 : i32
    %20 = arith.cmpi eq, %arg1, %c0_i32 : i32
    %21 = arith.extui %20 : i1 to i32
    %c0_i32_9 = arith.constant 0 : i32
    %22 = arith.cmpi ne, %21, %c0_i32_9 : i32
    scf.if %22 {
      %cst_34 = arith.constant 0xFF800000 : f32
      %62 = vector.broadcast %cst_34 : f32 to vector<16x1xf32>
      %c0_35 = arith.constant 0 : index
      %c0_36 = arith.constant 0 : index
      %63 = vector.load %arg8[%c0_35, %c0_36] : memref<16x1xf32, #tpu.memory_space<vmem>>, vector<16x1xf32>
      tpu.vector_store %arg8[%c0_35, %c0_36], %62 {strides = array<i32>} : memref<16x1xf32, #tpu.memory_space<vmem>>, vector<16x1xf32>,
      %cst_37 = arith.constant 0.000000e+00 : f32
      %64 = vector.broadcast %cst_37 : f32 to vector<16x1xf32>
      %c0_38 = arith.constant 0 : index
      %c0_39 = arith.constant 0 : index
      %65 = vector.load %arg9[%c0_38, %c0_39] : memref<16x1xf32, #tpu.memory_space<vmem>>, vector<16x1xf32>
      tpu.vector_store %arg9[%c0_38, %c0_39], %64 {strides = array<i32>} : memref<16x1xf32, #tpu.memory_space<vmem>>, vector<16x1xf32>,
      %cst_40 = arith.constant 0.000000e+00 : f32
      %66 = vector.broadcast %cst_40 : f32 to vector<16x1xf32>
      %c0_41 = arith.constant 0 : index
      %c0_42 = arith.constant 0 : index
      %67 = vector.load %arg10[%c0_41, %c0_42] : memref<16x1xf32, #tpu.memory_space<vmem>>, vector<16x1xf32>
      tpu.vector_store %arg10[%c0_41, %c0_42], %66 {strides = array<i32>} : memref<16x1xf32, #tpu.memory_space<vmem>>, vector<16x1xf32>,
      %cst_43 = arith.constant 0.000000e+00 : f32
      %68 = vector.broadcast %cst_43 : f32 to vector<16x1xf32>
      %c0_44 = arith.constant 0 : index
      %c0_45 = arith.constant 0 : index
      %69 = vector.load %arg11[%c0_44, %c0_45] : memref<16x1xf32, #tpu.memory_space<vmem>>, vector<16x1xf32>
      tpu.vector_store %arg11[%c0_44, %c0_45], %68 {strides = array<i32>} : memref<16x1xf32, #tpu.memory_space<vmem>>, vector<16x1xf32>,
    } else {
    }
    %c0_10 = arith.constant 0 : index
    %c0_11 = arith.constant 0 : index
    %23 = vector.load %arg8[%c0_10, %c0_11] : memref<16x1xf32, #tpu.memory_space<vmem>>, vector<16x1xf32>
    %cst_12 = arith.constant dense<0xFF800000> : vector<16xf32>
    %24 = vector.multi_reduction <maximumf>, %9, %cst_12 [1] : vector<16x128xf32> to vector<16xf32>
    %25 = vector.shape_cast %24 : vector<16xf32> to vector<16x1xf32>
    %26 = arith.maximumf %23, %25 : vector<16x1xf32>
    %27 = arith.subf %23, %26 : vector<16x1xf32>
    %28 = math.exp %27 : vector<16x1xf32>
    %c0_13 = arith.constant 0 : index
    %c0_14 = arith.constant 0 : index
    %29 = vector.load %arg9[%c0_13, %c0_14] : memref<16x1xf32, #tpu.memory_space<vmem>>, vector<16x1xf32>
    %30 = arith.mulf %28, %29 : vector<16x1xf32>
    %31 = vector.broadcast %26 : vector<16x1xf32> to vector<16x128xf32>
    %32 = arith.subf %9, %31 : vector<16x128xf32>
    %33 = math.exp %32 : vector<16x128xf32>
    %cst_15 = arith.constant dense<0.000000e+00> : vector<16xf32>
    %34 = vector.multi_reduction <add>, %33, %cst_15 [1] : vector<16x128xf32> to vector<16xf32>
    %35 = vector.shape_cast %34 : vector<16xf32> to vector<16x1xf32>
    %36 = arith.addf %30, %35 : vector<16x1xf32>
    %c0_16 = arith.constant 0 : index
    %c0_17 = arith.constant 0 : index
    %37 = vector.load %arg9[%c0_16, %c0_17] : memref<16x1xf32, #tpu.memory_space<vmem>>, vector<16x1xf32>
    tpu.vector_store %arg9[%c0_16, %c0_17], %36 {strides = array<i32>} : memref<16x1xf32, #tpu.memory_space<vmem>>, vector<16x1xf32>,
    %c0_18 = arith.constant 0 : index
    %c0_19 = arith.constant 0 : index
    %38 = vector.load %arg8[%c0_18, %c0_19] : memref<16x1xf32, #tpu.memory_space<vmem>>, vector<16x1xf32>
    tpu.vector_store %arg8[%c0_18, %c0_19], %26 {strides = array<i32>} : memref<16x1xf32, #tpu.memory_space<vmem>>, vector<16x1xf32>,
    %c128_i32_20 = arith.constant 128 : i32
    %39 = arith.muli %arg1, %c128_i32_20 : i32
    %c200_i32 = arith.constant 200 : i32
    %40 = arith.subi %c200_i32, %39 : i32
    %41 = vector.broadcast %40 : i32 to vector<1x128xi32>
    %42 = arith.cmpi slt, %13, %41 : vector<1x128xi32>
    %cst_21 = arith.constant 0.000000e+00 : f32
    %43 = vector.shape_cast %42 : vector<1x128xi1> to vector<1x128xi1>
    %44 = vector.broadcast %43 : vector<1x128xi1> to vector<16x128xi1>
    %45 = vector.broadcast %cst_21 : f32 to vector<16x128xf32>
    %46 = arith.select %44, %9, %45 : vector<16x128xi1>, vector<16x128xf32>
    %c0_22 = arith.constant 0 : index
    %c0_23 = arith.constant 0 : index
    %47 = vector.load %arg10[%c0_22, %c0_23] : memref<16x1xf32, #tpu.memory_space<vmem>>, vector<16x1xf32>
    %cst_24 = arith.constant dense<0.000000e+00> : vector<16xf32>
    %48 = vector.multi_reduction <add>, %46, %cst_24 [1] : vector<16x128xf32> to vector<16xf32>
    %49 = vector.shape_cast %48 : vector<16xf32> to vector<16x1xf32>
    %50 = arith.addf %47, %49 : vector<16x1xf32>
    %c0_25 = arith.constant 0 : index
    %c0_26 = arith.constant 0 : index
    %51 = vector.load %arg10[%c0_25, %c0_26] : memref<16x1xf32, #tpu.memory_space<vmem>>, vector<16x1xf32>
    tpu.vector_store %arg10[%c0_25, %c0_26], %50 {strides = array<i32>} : memref<16x1xf32, #tpu.memory_space<vmem>>, vector<16x1xf32>,
    %c0_27 = arith.constant 0 : index
    %c0_28 = arith.constant 0 : index
    %52 = vector.load %arg11[%c0_27, %c0_28] : memref<16x1xf32, #tpu.memory_space<vmem>>, vector<16x1xf32>
    %cst_29 = arith.constant 0.000000e+00 : f32
    %53 = vector.broadcast %cst_29 : f32 to vector<16x128xf32>
    %54 = arith.select %19, %9, %53 : vector<16x128xi1>, vector<16x128xf32>
    %cst_30 = arith.constant dense<0.000000e+00> : vector<16xf32>
    %55 = vector.multi_reduction <add>, %54, %cst_30 [1] : vector<16x128xf32> to vector<16xf32>
    %56 = vector.shape_cast %55 : vector<16xf32> to vector<16x1xf32>
    %57 = arith.addf %52, %56 : vector<16x1xf32>
    %c0_31 = arith.constant 0 : index
    %c0_32 = arith.constant 0 : index
    %58 = vector.load %arg11[%c0_31, %c0_32] : memref<16x1xf32, #tpu.memory_space<vmem>>, vector<16x1xf32>
    tpu.vector_store %arg11[%c0_31, %c0_32], %57 {strides = array<i32>} : memref<16x1xf32, #tpu.memory_space<vmem>>, vector<16x1xf32>,
    %c1_i32 = arith.constant 1 : i32
    %59 = arith.cmpi eq, %arg1, %c1_i32 : i32
    %60 = arith.extui %59 : i1 to i32
    %c0_i32_33 = arith.constant 0 : i32
    %61 = arith.cmpi ne, %60, %c0_i32_33 : i32
    scf.if %61 {
      %c0_34 = arith.constant 0 : index
      %c0_35 = arith.constant 0 : index
      %62 = vector.load %arg8[%c0_34, %c0_35] : memref<16x1xf32, #tpu.memory_space<vmem>>, vector<16x1xf32>
      %c0_36 = arith.constant 0 : index
      %c0_37 = arith.constant 0 : index
      %63 = vector.load %arg9[%c0_36, %c0_37] : memref<16x1xf32, #tpu.memory_space<vmem>>, vector<16x1xf32>
      %64 = math.log %63 : vector<16x1xf32>
      %65 = arith.addf %62, %64 : vector<16x1xf32>
      %c0_38 = arith.constant 0 : index
      %c0_39 = arith.constant 0 : index
      %66 = vector.load %arg11[%c0_38, %c0_39] : memref<16x1xf32, #tpu.memory_space<vmem>>, vector<16x1xf32>
      %67 = arith.subf %65, %66 : vector<16x1xf32>
      %cst_40 = arith.constant 2.000000e+02 : f32
      %68 = vector.broadcast %cst_40 : f32 to vector<16x1xf32>
      %69 = arith.mulf %68, %65 : vector<16x1xf32>
      %c0_41 = arith.constant 0 : index
      %c0_42 = arith.constant 0 : index
      %70 = vector.load %arg10[%c0_41, %c0_42] : memref<16x1xf32, #tpu.memory_space<vmem>>, vector<16x1xf32>
      %71 = arith.subf %69, %70 : vector<16x1xf32>
      %c0_i32_43 = arith.constant 0 : i32
      %72 = vector.broadcast %c0_i32_43 : i32 to vector<16x1xi32>
      %73 = arith.cmpi ne, %12, %72 : vector<16x1xi32>
      %74 = arith.extui %73 : vector<16x1xi1> to vector<16x1xi32>
      %75 = arith.sitofp %74 : vector<16x1xi32> to vector<16x1xf32>
      %76 = arith.mulf %67, %75 : vector<16x1xf32>
      %77 = vector.shape_cast %76 : vector<16x1xf32> to vector<1x16x1xf32>
      %cst_44 = arith.constant dense<0.000000e+00> : vector<1xf32>
      %78 = vector.multi_reduction <add>, %77, %cst_44 [1, 2] : vector<1x16x1xf32> to vector<1xf32>
      %79 = vector.shape_cast %78 : vector<1xf32> to vector<1x1x1xf32>
      %80 = vector.extract %79[0, 0, 0] : f32 from vector<1x1x1xf32>
      %81 = arith.mulf %71, %75 : vector<16x1xf32>
      %82 = vector.shape_cast %81 : vector<16x1xf32> to vector<1x16x1xf32>
      %cst_45 = arith.constant dense<0.000000e+00> : vector<1xf32>
      %83 = vector.multi_reduction <add>, %82, %cst_45 [1, 2] : vector<1x16x1xf32> to vector<1xf32>
      %84 = vector.shape_cast %83 : vector<1xf32> to vector<1x1x1xf32>
      %85 = vector.extract %84[0, 0, 0] : f32 from vector<1x1x1xf32>
      %86 = tpu.iota {dimensions = array<i32: 1>} : vector<1x16x128xi32>
      %c8_i32 = arith.constant 8 : i32
      %87 = vector.broadcast %c8_i32 : i32 to vector<1x16x128xi32>
      %88 = arith.cmpi slt, %86, %87 : vector<1x16x128xi32>
      %89 = vector.broadcast %80 : f32 to vector<1x16x128xf32>
      %90 = vector.broadcast %85 : f32 to vector<1x16x128xf32>
      %91 = arith.select %88, %89, %90 : vector<1x16x128xi1>, vector<1x16x128xf32>
      %c0_46 = arith.constant 0 : index
      %c0_47 = arith.constant 0 : index
      %c0_48 = arith.constant 0 : index
      %92 = vector.load %arg7[%c0_46, %c0_47, %c0_48] : memref<1x16x128xf32, #tpu.memory_space<vmem>>, vector<1x16x128xf32>
      tpu.vector_store %arg7[%c0_46, %c0_47, %c0_48], %91 {strides = array<i32>} : memref<1x16x128xf32, #tpu.memory_space<vmem>>, vector<1x16x128xf32>,
    } else {
    }
    return
  }
  func.func @transform_0(%arg0: i32, %arg1: i32) -> (i32, i32) {
    %c0_i32 = arith.constant 0 : i32
    %c0_i32_0 = arith.constant 0 : i32
    return %arg0, %c0_i32 : i32, i32
  }
  func.func @transform_1(%arg0: i32, %arg1: i32) -> (i32, i32, i32) {
    %c0_i32 = arith.constant 0 : i32
    %c0_i32_0 = arith.constant 0 : i32
    %c0_i32_1 = arith.constant 0 : i32
    %c0_i32_2 = arith.constant 0 : i32
    return %c0_i32, %c0_i32_0, %c0_i32_1 : i32, i32, i32
  }
  func.func @transform_2(%arg0: i32, %arg1: i32) -> (i32, i32, i32) {
    %c0_i32 = arith.constant 0 : i32
    %c0_i32_0 = arith.constant 0 : i32
    %c0_i32_1 = arith.constant 0 : i32
    %c0_i32_2 = arith.constant 0 : i32
    return %c0_i32, %c0_i32_0, %c0_i32_1 : i32, i32, i32
  }
  func.func @transform_3(%arg0: i32, %arg1: i32) -> (i32, i32) {
    %c0_i32 = arith.constant 0 : i32
    %c0_i32_0 = arith.constant 0 : i32
    return %arg0, %c0_i32 : i32, i32
  }
  func.func @transform_4(%arg0: i32, %arg1: i32) -> (i32, i32) {
    %c0_i32 = arith.constant 0 : i32
    return %arg0, %arg1 : i32, i32
  }
  func.func @transform_5(%arg0: i32, %arg1: i32) -> (i32, i32, i32) {
    %c0_i32 = arith.constant 0 : i32
    %c0_i32_0 = arith.constant 0 : i32
    %c0_i32_1 = arith.constant 0 : i32
    return %arg0, %c0_i32, %c0_i32_0 : i32, i32, i32
  }
}

</mosaic_0001>

<llo_original>
// kernel: _lambda_.1
$region0: #{_lambda_.1}
  #allocation0 [shape = 'u32[]', space=smem, size = 0x4, offset = 0x4, fixed_abs, tag = 'smem constant byte address 0x4 - core index']
  #allocation1 [shape = 'u32[72,128]{1,0:T(1,128)}', space=vmem, size = 0x9000, scoped, tag = 'internal scratch']
  #allocation2 [shape = 'f32[16,1]{1,0:T(8,128)}', space=vmem, size = 0x2000, scoped, tag = 'scratch operand']
  #allocation3 [shape = 'f32[16,1]{1,0:T(8,128)}', space=vmem, size = 0x2000, scoped, tag = 'scratch operand']
  #allocation4 [shape = 'f32[16,1]{1,0:T(8,128)}', space=vmem, size = 0x2000, scoped, tag = 'scratch operand']
  #allocation5 [shape = 'f32[16,1]{1,0:T(8,128)}', space=vmem, size = 0x2000, scoped, tag = 'scratch operand']
  %s0 = inlined_call_operand.vmem [shape: bf16[32,64], index: 0, kind: input, shape index: {}]
  %s1 = inlined_call_operand.vmem [shape: bf16[2,64,128], index: 1, kind: input, shape index: {}]
  %s2 = inlined_call_operand.vmem [shape: f32[2,1,128], index: 2, kind: input, shape index: {}]
  %s3 = inlined_call_operand.vmem [shape: s32[32,1], index: 3, kind: input, shape index: {}]
  %s4 = inlined_call_operand.hbm [shape: bf16[32,256], index: 4, kind: output, shape index: {0}]
  %s5 = inlined_call_operand.vmem [shape: f32[2,16,128], index: 5, kind: output, shape index: {1}]
  %6 = xla_tuple %s4, %s5
  %s7 = sld [smem:[#allocation0]]
  $region65: #{_lambda_.1} parent=0
    _
  %s9 = ssub.s32 1, %s7
  %s10 = scalar_select 0, %s9, %s7
  $region1: #{_lambda_.1} parent=0
    #allocation6 [shape = 'u8[8192]{0}', space=vmem, size = 0x2000, scoped, tag = 'output window, operand 0']
    #allocation7 [shape = 's32[2]{0}', space=sflag, size = 0x8, scoped, tag = 'scoped memory for _lambda_.1']
    %11 = vsyncpa [#allocation7], 0
    %s12 = scalar_lea.sflag [#allocation7], 1
    %13 = vsyncpa %s12, 0
    loop: start=0, step=1, limit=6
    $region2: #{_lambda_.1} parent=1 // loop_pre_header
      _
    $region3: #{_lambda_.1} parent=1 // loop_header
      %s15 = sphi 0, %s19
      %p16 = scmp.ge.s32.totalorder %s15, 6
      %s22 = sphi 0, %s34
      %s23 = sphi 0, %s30
      %s24 = sphi 0, %s22
      %s25 = sphi 0, %s23
      %s26 = sphi 0, %s24
      %s27 = sphi 0, %s25
      %s37 = sphi 0, %s39
      %s40 = sphi 0, %s37
      %s41 = sphi 0, %s40
      %s57 = sphi 0, %s41
      %s61 = sphi 0, %s61
      %s63 = sphi 0, %s61
      %s64 = sphi 0, %s63
      %s78 = sphi 0, %s64
      %s82 = sphi 0, %s82
      %s84 = sphi 0, %s82
      %s85 = sphi 0, %s84
      %s99 = sphi 0, %s85
      %s105 = sphi 0, %s107
      %s108 = sphi 0, %s105
      %s109 = sphi 0, %s108
      %s125 = sphi 0, %s109
      %s133 = sphi 0, %s135
      %s136 = sphi 0, %s133
      %s137 = sphi 0, %s136
      %s153 = sphi 0, %s137
      %s159 = sphi 0, %s161
      %s162 = sphi 0, %s159
      %s163 = sphi 0, %s162
      %s179 = sphi 0, %s163
    $region4: #{_lambda_.1} parent=1 // loop_header_branch
      %18 = sbr.rel (%p16) target = $region8
    $region5: #{_lambda_.1} parent=1 // loop_body
      %s20 = ssub.s32 %s15, 1
      %s21 = ssub.s32 %s15, 2
      %s28 = sadd.s32 1, %s23
      %p29 = scmp.ge.s32.totalorder %s28, 2
      %s30 = scalar_select %p29, 0, %s28
      %s31 = sadd.s32 1, %s22
      %s32 = scalar_select %p29, %s31, %s22
      %p33 = scmp.ge.s32.totalorder %s32, 2
      %s34 = scalar_select %p33, 0, %s32
      %s35 = ssub.s32 %s22, %s34
      %p36 = scmp.eq.s32.totalorder %s35, 0
      %s38 = sadd.s32 %s37, 1
      %s39 = scalar_select %p36, %s37, %s38
      %p42 = pneg %p36
      %p43 = scmp.eq.s32.totalorder %s15, 3
      %p44 = por %p42, %p43
      %p45 = scmp.ne.s32.totalorder %s37, %s40
      %p46 = scmp.eq.s32.totalorder %s15, 0
      %p47 = por %p45, %p46
      %p48 = scmp.ne.s32.totalorder %s37, %s40
      %p49 = scmp.eq.s32.totalorder %s20, 3
      %p50 = por %p48, %p49
      %p51 = scmp.ne.s32.totalorder %s40, %s41
      %p52 = scmp.eq.s32.totalorder %s20, 0
      %p53 = por %p51, %p52
      %p54 = scmp.ne.s32.totalorder %s40, %s41
      %p55 = scmp.eq.s32.totalorder %s21, 3
      %p56 = por %p54, %p55
      %p58 = scmp.ne.s32.totalorder %s41, %s57
      %p59 = scmp.eq.s32.totalorder %s21, 0
      %p60 = por %p58, %p59
      %s62 = sadd.s32 %s61, 1
      %p65 = scmp.eq.s32.totalorder %s15, 3
      %p66 = scmp.ne.s32.totalorder %s61, %s63
      %p67 = scmp.eq.s32.totalorder %s15, 0
      %p68 = por %p66, %p67
      %p69 = scmp.ne.s32.totalorder %s61, %s63
      %p70 = scmp.eq.s32.totalorder %s20, 3
      %p71 = por %p69, %p70
      %p72 = scmp.ne.s32.totalorder %s63, %s64
      %p73 = scmp.eq.s32.totalorder %s20, 0
      %p74 = por %p72, %p73
      %p75 = scmp.ne.s32.totalorder %s63, %s64
      %p76 = scmp.eq.s32.totalorder %s21, 3
      %p77 = por %p75, %p76
      %p79 = scmp.ne.s32.totalorder %s64, %s78
      %p80 = scmp.eq.s32.totalorder %s21, 0
      %p81 = por %p79, %p80
      %s83 = sadd.s32 %s82, 1
      %p86 = scmp.eq.s32.totalorder %s15, 3
      %p87 = scmp.ne.s32.totalorder %s82, %s84
      %p88 = scmp.eq.s32.totalorder %s15, 0
      %p89 = por %p87, %p88
      %p90 = scmp.ne.s32.totalorder %s82, %s84
      %p91 = scmp.eq.s32.totalorder %s20, 3
      %p92 = por %p90, %p91
      %p93 = scmp.ne.s32.totalorder %s84, %s85
      %p94 = scmp.eq.s32.totalorder %s20, 0
      %p95 = por %p93, %p94
      %p96 = scmp.ne.s32.totalorder %s84, %s85
      %p97 = scmp.eq.s32.totalorder %s21, 3
      %p98 = por %p96, %p97
      %p100 = scmp.ne.s32.totalorder %s85, %s99
      %p101 = scmp.eq.s32.totalorder %s21, 0
      %p102 = por %p100, %p101
      %s103 = ssub.s32 %s22, %s34
      %p104 = scmp.eq.s32.totalorder %s103, 0
      %s106 = sadd.s32 %s105, 1
      %s107 = scalar_select %p104, %s105, %s106
      %p110 = pneg %p104
      %p111 = scmp.eq.s32.totalorder %s15, 3
      %p112 = por %p110, %p111
      %p113 = scmp.ne.s32.totalorder %s105, %s108
      %p114 = scmp.eq.s32.totalorder %s15, 0
      %p115 = por %p113, %p114
      %p116 = scmp.ne.s32.totalorder %s105, %s108
      %p117 = scmp.eq.s32.totalorder %s20, 3
      %p118 = por %p116, %p117
      %p119 = scmp.ne.s32.totalorder %s108, %s109
      %p120 = scmp.eq.s32.totalorder %s20, 0
      %p121 = por %p119, %p120
      %p122 = scmp.ne.s32.totalorder %s108, %s109
      %p123 = scmp.eq.s32.totalorder %s21, 3
      %p124 = por %p122, %p123
      %p126 = scmp.ne.s32.totalorder %s109, %s125
      %p127 = scmp.eq.s32.totalorder %s21, 0
      %p128 = por %p126, %p127
      %s129 = ssub.s32 %s22, %s34
      %s130 = ssub.s32 %s23, %s30
      %s131 = sor.u32 %s129, %s130
      %p132 = scmp.eq.s32.totalorder %s131, 0
      %s134 = sadd.s32 %s133, 1
      %s135 = scalar_select %p132, %s133, %s134
      %p138 = pneg %p132
      %p139 = scmp.eq.s32.totalorder %s15, 3
      %p140 = por %p138, %p139
      %p141 = scmp.ne.s32.totalorder %s133, %s136
      %p142 = scmp.eq.s32.totalorder %s15, 0
      %p143 = por %p141, %p142
      %p144 = scmp.ne.s32.totalorder %s133, %s136
      %p145 = scmp.eq.s32.totalorder %s20, 3
      %p146 = por %p144, %p145
      %p147 = scmp.ne.s32.totalorder %s136, %s137
      %p148 = scmp.eq.s32.totalorder %s20, 0
      %p149 = por %p147, %p148
      %p150 = scmp.ne.s32.totalorder %s136, %s137
      %p151 = scmp.eq.s32.totalorder %s21, 3
      %p152 = por %p150, %p151
      %p154 = scmp.ne.s32.totalorder %s137, %s153
      %p155 = scmp.eq.s32.totalorder %s21, 0
      %p156 = por %p154, %p155
      %s157 = ssub.s32 %s22, %s34
      %p158 = scmp.eq.s32.totalorder %s157, 0
      %s160 = sadd.s32 %s159, 1
      %s161 = scalar_select %p158, %s159, %s160
      %p164 = pneg %p158
      %p165 = scmp.eq.s32.totalorder %s15, 3
      %p166 = por %p164, %p165
      %p167 = scmp.ne.s32.totalorder %s159, %s162
      %p168 = scmp.eq.s32.totalorder %s15, 0
      %p169 = por %p167, %p168
      %p170 = scmp.ne.s32.totalorder %s159, %s162
      %p171 = scmp.eq.s32.totalorder %s20, 3
      %p172 = por %p170, %p171
      %p173 = scmp.ne.s32.totalorder %s162, %s163
      %p174 = scmp.eq.s32.totalorder %s20, 0
      %p175 = por %p173, %p174
      %p176 = scmp.ne.s32.totalorder %s162, %s163
      %p177 = scmp.eq.s32.totalorder %s21, 3
      %p178 = por %p176, %p177
      %p180 = scmp.ne.s32.totalorder %s163, %s179
      %p181 = scmp.eq.s32.totalorder %s21, 0
      %p182 = por %p180, %p181
      %p183 = scmp.le.s32.totalorder 1, %s15
      %p184 = scmp.lt.s32.totalorder %s15, 5
      %p185 = pnand %p183, %p184
      %p186 = pneg %p185
      // Predicated region
      $region9: #{_lambda_.1} parent=5 // pred_check
        _
      $region10: #{_lambda_.1} parent=5 // pred_check_branch
        %188 = sbr.rel (%p185) target = $region12
      $region11: #{_lambda_.1} parent=5 // pred_region
        %s189 = ssub.s32 %s15, 1
        // Predicated region
        $region13: #{_lambda_.1} parent=11 // pred_check
          %p190 = pneg %p74
        $region14: #{_lambda_.1} parent=11 // pred_check_branch
          %192 = sbr.rel (%p190) target = $region16
        $region15: #{_lambda_.1} parent=11 // pred_region
          _
        $region16: #{_lambda_.1} parent=11 // pred_fallthru
          _
        // Predicated region
        $region17: #{_lambda_.1} parent=11 // pred_check
          %p193 = pneg %p95
        $region18: #{_lambda_.1} parent=11 // pred_check_branch
          %195 = sbr.rel (%p193) target = $region20
        $region19: #{_lambda_.1} parent=11 // pred_region
          _
        $region20: #{_lambda_.1} parent=11 // pred_fallthru
          _
      $region12: #{_lambda_.1} parent=5 // pred_fallthru
        _
      %p196 = scmp.lt.s32.totalorder %s15, 4
      // Predicated region
      $region21: #{_lambda_.1} parent=5 // pred_check
        %p197 = pneg %p196
      $region22: #{_lambda_.1} parent=5 // pred_check_branch
        %199 = sbr.rel (%p197) target = $region24
      $region23: #{_lambda_.1} parent=5 // pred_region
        // Predicated region
        $region25: #{_lambda_.1} parent=23 // pred_check
          %p200 = pneg %p47
        $region26: #{_lambda_.1} parent=23 // pred_check_branch
          %202 = sbr.rel (%p200) target = $region28
        $region27: #{_lambda_.1} parent=23 // pred_region
          %s203 = smul.u32 2, %s22
          %p204 = scmp.lt.s32.totalorder %s203, 3
          %s205 = scalar_select %p204, %s203, 3
          %s206 = smul.addr %s205, 4
          %s207 = scalar_lea.vmem %s0, %s206
          %s208 = smul.u32 2, %s22
        $region28: #{_lambda_.1} parent=23 // pred_fallthru
          _
        // Predicated region
        $region29: #{_lambda_.1} parent=23 // pred_check
          %p209 = pneg %p115
        $region30: #{_lambda_.1} parent=23 // pred_check_branch
          %211 = sbr.rel (%p209) target = $region32
        $region31: #{_lambda_.1} parent=23 // pred_region
          %s212 = smul.u32 2, %s22
          %p213 = scmp.lt.s32.totalorder %s212, 3
          %s214 = scalar_select %p213, %s212, 3
          %s215 = smul.addr %s214, 8
          %s216 = scalar_lea.vmem %s3, %s215
          %s217 = smul.u32 2, %s22
        $region32: #{_lambda_.1} parent=23 // pred_fallthru
          _
      $region24: #{_lambda_.1} parent=5 // pred_fallthru
        _
      %p218 = scmp.le.s32.totalorder 1, %s15
      %p219 = scmp.lt.s32.totalorder %s15, 5
      %p220 = pnand %p218, %p219
      %p221 = pneg %p220
      // Predicated region
      $region33: #{_lambda_.1} parent=5 // pred_check
        _
      $region34: #{_lambda_.1} parent=5 // pred_check_branch
        %223 = sbr.rel (%p220) target = $region36
      $region35: #{_lambda_.1} parent=5 // pred_region
        %s224 = ssub.s32 %s15, 1
        %s225 = smul.u32 2, %s24
        %p226 = scmp.lt.s32.totalorder %s225, 3
        %s227 = scalar_select %p226, %s225, 3
        %s228 = smul.addr %s227, 4
        %s229 = scalar_lea.vmem %s0, %s228
        %p230 = pneg %p53
        %p231 = pneg %p50
        %p232 = pneg %p74
        %p233 = pneg %p71
        %p234 = pneg %p95
        %p235 = pneg %p92
        %s236 = smul.u32 2, %s24
        %p237 = scmp.lt.s32.totalorder %s236, 3
        %s238 = scalar_select %p237, %s236, 3
        %s239 = smul.addr %s238, 8
        %s240 = scalar_lea.vmem %s3, %s239
        %p241 = pneg %p121
        %p242 = pneg %p118
        %p243 = pneg %p149
        %p244 = pneg %p146
        %s245 = sand.u32 %s136, 1
        %s246 = scalar_lea.sflag [#allocation7], %s245
        %s247 = sand.u32 %s136, 1
        %s248 = smul.addr %s247, 8
        %s249 = scalar_lea.vmem [#allocation6], %s248
        %p250 = pneg %p175
        %p251 = pneg %p172
        %p252 = scmp.lt.s32.totalorder %s24, 1
        %s253 = scalar_select %p252, %s24, 1
        %s254 = smul.addr %s253, 2
        %s255 = smul.addr %s254, 8
        %s256 = scalar_lea.vmem %s5, %s255
        %s257 = smul.u32 2, %s24
        %p258 = scmp.lt.s32.totalorder %s257, 3
        %s259 = scalar_select %p258, %s257, 3
        %s260 = smul.addr %s259, 4
        %s261 = scalar_lea.vmem %s0, %s260
        %s262 = smul.u32 2, %s24
        %s263 = smul.u32 2, %s24
        %p264 = scmp.lt.s32.totalorder %s263, 3
        %s265 = scalar_select %p264, %s263, 3
        %s266 = smul.addr %s265, 8
        %s267 = scalar_lea.vmem %s3, %s266
        %s268 = smul.u32 2, %s24
        %s269 = smul.u32 2, %s24
        %p270 = scmp.lt.s32.totalorder %s24, 1
        %s271 = scalar_select %p270, %s24, 1
        %s272 = smul.addr %s271, 2
        %s273 = smul.addr %s272, 8
        %s274 = scalar_lea.vmem %s5, %s273
        %s276 = smul.u32 %s25, 8
        %s277 = smul.addr %s276, 4
        %s278 = scalar_lea.vmem %s1, %s277
        %v279 = vld [vmem:[%s278] sm:$0xf]
        %v280 = vld [vmem:[%s278 + $0x4] sm:$0xf]
        %v281 = vld [vmem:[%s278 + $0x8] sm:$0xf]
        %v282 = vld [vmem:[%s278 + $0xc] sm:$0xf]
        %v283 = vld [vmem:[%s278 + $0x10] sm:$0xf]
        %v284 = vld [vmem:[%s278 + $0x14] sm:$0xf]
        %v285 = vld [vmem:[%s278 + $0x18] sm:$0xf]
        %v286 = vld [vmem:[%s278 + $0x1c] sm:$0xf]
        %s287 = scalar_lea.vmem %s2, %s25
        %v288 = vld [vmem:[%s287] sm:$0x1]
        %v289 = vld [vmem:[%s261] sm:$0xf]
        %v290 = vld [vmem:[%s261 + $0x4] sm:$0xf]
        %v292 = vperm.slane %v288, 0
        %v296 = vunpack.c.l.b16 %v289
        %v297 = vunpack.c.l.b16 %v290
        %v298 = vpack.c.b16 %v297, %v296
        %v307 = vunpack.c.l.b16 %v279
        %v308 = vunpack.c.l.b16 %v280
        %v309 = vunpack.c.l.b16 %v281
        %v310 = vunpack.c.l.b16 %v282
        %v311 = vunpack.c.l.b16 %v283
        %v312 = vunpack.c.l.b16 %v284
        %v313 = vunpack.c.l.b16 %v285
        %v314 = vunpack.c.l.b16 %v286
        %v315 = vpack.c.b16 %v308, %v307
        %v316 = vpack.c.b16 %v310, %v309
        %v317 = vpack.c.b16 %v312, %v311
        %v318 = vpack.c.b16 %v314, %v313
        %vm323 = vcmask 523264
        %v325 = vsel %vm323, %v298, 0
        %327 = vmatpush.bf16.msra.mxu0 0
        %328 = vmatpush.bf16.msra.mxu0 0
        %329 = vmatpush.bf16.msra.mxu0 0
        %330 = vmatpush.bf16.msra.mxu0 0
        %331 = vmatpush.bf16.msra.mxu0 %v318
        %332 = vmatpush.bf16.msra.mxu0 %v317
        %333 = vmatpush.bf16.msra.mxu0 %v316
        %334 = vmatpush.bf16.msra.mxu0 %v315
        %335 = vmatmul.bf16.gmra.mxu0 %v325
        %v336 = vpop.f32.mrf.mxu0
        %v337 = vadd.f32 %v292, %v336
        %v338 = vpop.f32.mrf.mxu0
        %v339 = vadd.f32 %v292, %v338
        %340 = vdwg.mxu0
        %v341 = vpack.c.bf16 %v337, %v337
        %v342 = vpack.c.bf16 %v339, %v339
        %343 = vst [vmem:[%s249] sm:$0xf] %v341
        %344 = vst [vmem:[%s249 + $0x4] sm:$0xf] %v342
        %v345 = vld [vmem:[%s267] sm:$0xff]
        %v346 = vld [vmem:[%s267 + $0x8] sm:$0xff]
        %v347 = vlaneseq
        %v348 = vand.u32 %v347, 127
        %s349 = smul.u32 %s25, 128
        %v350 = vstv %s349
        %v351 = vsub.s32 %v345, %v350
        %v352 = vsub.s32 %v346, %v350
        %353 = vset.pattern.permute.xlu0 0
        %354 = vperm.xlu0 %353, %v351
        %v355 = vpop.permute.xlu0 %354
        %356 = vset.pattern.permute.xlu0 0
        %357 = vperm.xlu0 %356, %v352
        %v358 = vpop.permute.xlu0 %357
        %vm359 = vcmp.eq.s32.totalorder %v348, %v355
        %vm360 = vcmp.eq.s32.totalorder %v348, %v358
        %p361 = scmp.eq.s32.totalorder %s25, 0
        // Predicated region
        $region37: #{_lambda_.1} parent=35 // pred_check
          %p362 = pneg %p361
        $region38: #{_lambda_.1} parent=35 // pred_check_branch
          %364 = sbr.rel (%p362) target = $region40
        $region39: #{_lambda_.1} parent=35 // pred_region
          %vm365 = vcmask 7168
          %366 = vst.msk [vmem:[#allocation2] sm:$0xff] %vm365, -inf
          %367 = vst.msk [vmem:[#allocation2 + $0x8] sm:$0xff] %vm365, -inf
          %368 = vst.msk [vmem:[#allocation3] sm:$0xff] %vm365, 0.0
          %369 = vst.msk [vmem:[#allocation3 + $0x8] sm:$0xff] %vm365, 0.0
          %370 = vst.msk [vmem:[#allocation4] sm:$0xff] %vm365, 0.0
          %371 = vst.msk [vmem:[#allocation4 + $0x8] sm:$0xff] %vm365, 0.0
          %372 = vst.msk [vmem:[#allocation5] sm:$0xff] %vm365, 0.0
          %373 = vst.msk [vmem:[#allocation5 + $0x8] sm:$0xff] %vm365, 0.0
        $region40: #{_lambda_.1} parent=35 // pred_fallthru
          _
        %v374 = vld [vmem:[#allocation2] sm:$0xff]
        %v375 = vld [vmem:[#allocation2 + $0x8] sm:$0xff]
        %376 = vmax.xlane.f32.xlu0 %v337
        %v377 = vpop.xlane.xlu0 %376
        %378 = vmax.xlane.f32.xlu0 %v339
        %v379 = vpop.xlane.xlu0 %378
        %v380 = vmax.f32 %v374, %v377
        %v381 = vmax.f32 %v375, %v379
        %v382 = vsub.f32 %v374, %v380
        %v383 = vsub.f32 %v375, %v381
        %v384 = vmul.f32 %v382, 1.442695
        %v385 = vpow.pop %v384
        %v386 = vmul.f32 %v383, 1.442695
        %v387 = vpow.pop %v386
        %v388 = vld [vmem:[#allocation3] sm:$0xff]
        %v389 = vld [vmem:[#allocation3 + $0x8] sm:$0xff]
        %v390 = vmul.f32 %v385, %v388
        %v391 = vmul.f32 %v387, %v389
        %393 = vset.pattern.permute.xlu0 0
        %394 = vperm.xlu0 %393, %v380
        %v395 = vpop.permute.xlu0 %394
        %398 = vset.pattern.permute.xlu0 0
        %399 = vperm.xlu0 %398, %v381
        %v400 = vpop.permute.xlu0 %399
        %v402 = vsub.f32 %v337, %v395
        %v403 = vsub.f32 %v339, %v400
        %v404 = vmul.f32 %v402, 1.442695
        %v405 = vpow.pop %v404
        %v406 = vmul.f32 %v403, 1.442695
        %v407 = vpow.pop %v406
        %408 = vadd.xlane.f32.xlu0 %v405
        %v409 = vpop.xlane.xlu0 %408
        %410 = vadd.xlane.f32.xlu0 %v407
        %v411 = vpop.xlane.xlu0 %410
        %v412 = vadd.f32 %v390, %v409
        %v413 = vadd.f32 %v391, %v411
        %vm414 = vcmask 7168
        %415 = vst.msk [vmem:[#allocation3] sm:$0xff] %vm414, %v412
        %416 = vst.msk [vmem:[#allocation3 + $0x8] sm:$0xff] %vm414, %v413
        %417 = vst.msk [vmem:[#allocation2] sm:$0xff] %vm414, %v380
        %418 = vst.msk [vmem:[#allocation2 + $0x8] sm:$0xff] %vm414, %v381
        %s419 = ssub.s32 200, %s349
        %v420 = vstv %s419
        %vm421 = vcmp.lt.s32.totalorder %v348, %v420
        %v422 = vsel %vm421, 1, 0
        %vm423 = vcmp.eq.s32.totalorder %v422, 1
        %v424 = vsel %vm423, %v337, 0.0
        %v425 = vsel %vm423, %v339, 0.0
        %v426 = vld [vmem:[#allocation4] sm:$0xff]
        %v427 = vld [vmem:[#allocation4 + $0x8] sm:$0xff]
        %428 = vadd.xlane.f32.xlu0 %v424
        %v429 = vpop.xlane.xlu0 %428
        %430 = vadd.xlane.f32.xlu0 %v425
        %v431 = vpop.xlane.xlu0 %430
        %v432 = vadd.f32 %v426, %v429
        %v433 = vadd.f32 %v427, %v431
        %434 = vst.msk [vmem:[#allocation4] sm:$0xff] %vm414, %v432
        %435 = vst.msk [vmem:[#allocation4 + $0x8] sm:$0xff] %vm414, %v433
        %v436 = vld [vmem:[#allocation5] sm:$0xff]
        %v437 = vld [vmem:[#allocation5 + $0x8] sm:$0xff]
        %v438 = vsel %vm359, %v337, 0.0
        %v439 = vsel %vm360, %v339, 0.0
        %440 = vadd.xlane.f32.xlu0 %v438
        %v441 = vpop.xlane.xlu0 %440
        %442 = vadd.xlane.f32.xlu0 %v439
        %v443 = vpop.xlane.xlu0 %442
        %v444 = vadd.f32 %v436, %v441
        %v445 = vadd.f32 %v437, %v443
        %446 = vst.msk [vmem:[#allocation5] sm:$0xff] %vm414, %v444
        %447 = vst.msk [vmem:[#allocation5 + $0x8] sm:$0xff] %vm414, %v445
        %p448 = scmp.eq.s32.totalorder %s25, 1
        // Predicated region
        $region41: #{_lambda_.1} parent=35 // pred_check
          %p449 = pneg %p448
        $region42: #{_lambda_.1} parent=35 // pred_check_branch
          %451 = sbr.rel (%p449) target = $region44
        $region43: #{_lambda_.1} parent=35 // pred_region
          %v452 = vld [vmem:[#allocation2] sm:$0xff]
          %v453 = vld [vmem:[#allocation2 + $0x8] sm:$0xff]
          %v454 = vld [vmem:[#allocation3] sm:$0xff]
          %v455 = vld [vmem:[#allocation3 + $0x8] sm:$0xff]
          %v456 = vlog2.pop %v454
          %v457 = vmul.f32 %v456, 0.6931472
          %v458 = vlog2.pop %v455
          %v459 = vmul.f32 %v458, 0.6931472
          %v460 = vadd.f32 %v452, %v457
          %v461 = vadd.f32 %v453, %v459
          %v462 = vld [vmem:[#allocation5] sm:$0xff]
          %v463 = vld [vmem:[#allocation5 + $0x8] sm:$0xff]
          %v464 = vsub.f32 %v460, %v462
          %v465 = vsub.f32 %v461, %v463
          %v466 = vmul.f32 %v460, 200.0
          %v467 = vmul.f32 %v461, 200.0
          %v468 = vld [vmem:[#allocation4] sm:$0xff]
          %v469 = vld [vmem:[#allocation4 + $0x8] sm:$0xff]
          %v470 = vsub.f32 %v466, %v468
          %v471 = vsub.f32 %v467, %v469
          %vm472 = vcmp.ne.s32.totalorder %v345, 0
          %vm473 = vcmp.ne.s32.totalorder %v346, 0
          %v474 = vsel %vm472, 1, 0
          %v475 = vsel %vm473, 1, 0
          %v476 = vcvt.s32.f32 %v474
          %v477 = vcvt.s32.f32 %v475
          %v478 = vmul.f32 %v464, %v476
          %v479 = vmul.f32 %v465, %v477
          %v480 = vsel %vm414, %v478, 0.0
          %v481 = vsel %vm414, %v479, 0.0
          %v482 = vadd.f32 %v480, %v481
          %483 = vadd.xlane.f32.xlu0 %v482
          %v484 = vpop.xlane.xlu0 %483
          %v485 = vrot.slane %v484, 4
          %v486 = vadd.f32 %v484, %v485
          %v487 = vrot.slane %v486, 2
          %v488 = vadd.f32 %v486, %v487
          %v489 = vrot.slane %v488, 1
          %v490 = vadd.f32 %v488, %v489
          %s491 = vtos %v490
          %v492 = vmul.f32 %v470, %v476
          %v493 = vmul.f32 %v471, %v477
          %v494 = vsel %vm414, %v492, 0.0
          %v495 = vsel %vm414, %v493, 0.0
          %v496 = vadd.f32 %v494, %v495
          %497 = vadd.xlane.f32.xlu0 %v496
          %v498 = vpop.xlane.xlu0 %497
          %v499 = vrot.slane %v498, 4
          %v500 = vadd.f32 %v498, %v499
          %v501 = vrot.slane %v500, 2
          %v502 = vadd.f32 %v500, %v501
          %v503 = vrot.slane %v502, 1
          %v504 = vadd.f32 %v502, %v503
          %s505 = vtos %v504
          %v506 = vlaneseq
          %v507 = vshrl.u32 %v506, 7
          %v508 = vadd.s32 %v507, 8
          %vm509 = vcmp.lt.s32.totalorder %v507, 8
          %vm510 = vcmp.lt.s32.totalorder %v508, 8
          %v511 = vstv %s491
          %v512 = vstv %s505
          %v513 = vsel %vm509, %v511, %v512
          %v514 = vsel %vm510, %v511, %v512
          %515 = vst [vmem:[%s274] sm:$0xff] %v513
          %516 = vst [vmem:[%s274 + $0x8] sm:$0xff] %v514
        $region44: #{_lambda_.1} parent=35 // pred_fallthru
          _
        %s517 = sand.u32 %s136, 1
        %s518 = scalar_lea.sflag [#allocation7], %s517
        %s519 = sand.u32 %s136, 1
        %s520 = smul.addr %s519, 8
        %s521 = scalar_lea.vmem [#allocation6], %s520
        %p522 = scmp.lt.s32.totalorder %s24, 1
        %s523 = scalar_select %p522, %s24, 1
        %s524 = smul.addr %s523, 2
        %s525 = smul.addr %s524, 8
        %s526 = scalar_lea.vmem %s5, %s525
        // Predicated region
        $region45: #{_lambda_.1} parent=35 // pred_check
          %p527 = pneg %p146
        $region46: #{_lambda_.1} parent=35 // pred_check_branch
          %529 = sbr.rel (%p527) target = $region48
        $region47: #{_lambda_.1} parent=35 // pred_region
          %s530 = smul.u32 2, %s24
          %532 = vsyncadd %s518, 0
          %s533 = smul.addr %s530, 2
          %s534 = sadd.s32 %s25, %s533
          %s535 = smul.addr %s534, 4
          %s536 = scalar_lea.hbm %s4, %s535
          %s537 = sshll.u32 %s521, 4
          %s538 = int_to_ptr.vmem [resolvable:$true] %s537
          %s539 = sshll.u32 %s536, 4
          %s540 = int_to_ptr.hbm [resolvable:$true] %s539
          %545 = dma.vmem_to_hbm [thread:$0]  %s538, 128, %s540, %s518, 64, 128, 4
        $region48: #{_lambda_.1} parent=35 // pred_fallthru
          _
        // Predicated region
        $region49: #{_lambda_.1} parent=35 // pred_check
          %p546 = pneg %p172
        $region50: #{_lambda_.1} parent=35 // pred_check_branch
          %548 = sbr.rel (%p546) target = $region52
        $region51: #{_lambda_.1} parent=35 // pred_region
          _
        $region52: #{_lambda_.1} parent=35 // pred_fallthru
          _
      $region36: #{_lambda_.1} parent=5 // pred_fallthru
        _
      %p549 = scmp.le.s32.totalorder 2, %s15
      // Predicated region
      $region53: #{_lambda_.1} parent=5 // pred_check
        %p550 = pneg %p549
      $region54: #{_lambda_.1} parent=5 // pred_check_branch
        %552 = sbr.rel (%p550) target = $region56
      $region55: #{_lambda_.1} parent=5 // pred_region
        %s553 = ssub.s32 %s15, 2
        // Predicated region
        $region57: #{_lambda_.1} parent=55 // pred_check
          %p554 = pneg %p152
        $region58: #{_lambda_.1} parent=55 // pred_check_branch
          %556 = sbr.rel (%p554) target = $region60
        $region59: #{_lambda_.1} parent=55 // pred_region
          %s557 = sand.u32 %s137, 1
          %s558 = scalar_lea.sflag [#allocation7], %s557
          %s559 = sand.u32 %s137, 1
          %s560 = smul.addr %s559, 8
          %s561 = scalar_lea.vmem [#allocation6], %s560
          %563 = dma.done %s558, 128
        $region60: #{_lambda_.1} parent=55 // pred_fallthru
          _
        // Predicated region
        $region61: #{_lambda_.1} parent=55 // pred_check
          %p564 = pneg %p178
        $region62: #{_lambda_.1} parent=55 // pred_check_branch
          %566 = sbr.rel (%p564) target = $region64
        $region63: #{_lambda_.1} parent=55 // pred_region
          %p567 = scmp.lt.s32.totalorder %s26, 1
          %s568 = scalar_select %p567, %s26, 1
          %s569 = smul.addr %s568, 2
          %s570 = smul.addr %s569, 8
          %s571 = scalar_lea.vmem %s5, %s570
        $region64: #{_lambda_.1} parent=55 // pred_fallthru
          _
      $region56: #{_lambda_.1} parent=5 // pred_fallthru
        _
    $region6: #{_lambda_.1} parent=1 // loop_footer
      %s19 = sadd.s32 1, %s15
    $region7: #{_lambda_.1} parent=1 // loop_footer_branch
      %14 = sbr.rel target = $region3
    $region8: #{_lambda_.1} parent=1 // loop_exit
      _
    %572 = vsyncpa [#allocation7], 1
    %s573 = scalar_lea.sflag [#allocation7], 1
    %574 = vsyncpa %s573, 1

</llo_original>
